<compile_context>
chip_gen: v6e
topology: v6e:2x2x1
jax: 0.10.0
libtpu: 0.0.40
codegen_flags: <defaults>
</compile_context>

<pallas_src>
import jax
import jax.numpy as jnp
from jax.experimental import pallas as pl
from jax.experimental.pallas import tpu as pltpu


def _gather_rows_kernel(ids_ref, emb_hbm, out_ref, sem):
    """Gather B embedding rows with concurrent manual DMAs in one grid step.

    ids_ref : SMEM (B,) int32           -- scalar-prefetched class ids
    emb_hbm : HBM  (n_classes, D)       -- embedding table (memory_space=pl.ANY)
    out_ref : VMEM (B, 1, D)            -- whole output block (single grid step)
    sem     : DMA semaphores, shape (B,)
    """
    B = out_ref.shape[0]

    # Issue all row gathers concurrently (B is static -> unrolled).
    copies = []
    for i in range(B):
        row = ids_ref[i]                                # scalar read from SMEM
        cp = pltpu.make_async_copy(
            emb_hbm.at[pl.ds(row, 1)],                  # (1, D) table row in HBM
            out_ref.at[i],                              # (1, D) output slot in VMEM
            sem.at[i],
        )
        cp.start()
        copies.append(cp)

    # Wait for all of them; total latency ~ one row fetch, not B serialized.
    # The waits are sequenced before the pipeline's output writeback, so no
    # extra dependency pinning is required.
    for cp in copies:
        cp.wait()


def class_embedder_forward(class_ids, embedding_table):
    """Pallas equivalent of ClassEmbedder.forward.

    Args:
      class_ids: (B,) integer class indices (i.e. batch[key]).
      embedding_table: (n_classes, embed_dim) float32.

    Returns:
      (B, 1, embed_dim) float32 — embedding(batch[key][:, None]).
    """
    B = class_ids.shape[0]
    n_classes, D = embedding_table.shape

    # Safety clamp so an out-of-range id cannot drive an out-of-bounds DMA.
    ids = jnp.clip(class_ids.astype(jnp.int32), 0, n_classes - 1)

    grid_spec = pltpu.PrefetchScalarGridSpec(
        num_scalar_prefetch=1,
        grid=(1,),  # single grid step: all gathers issued concurrently inside
        in_specs=[
            # Table stays in HBM; the kernel gathers rows manually by id.
            pl.BlockSpec(memory_space=pl.ANY),
        ],
        # Whole (B, 1, D) output is one block, written directly (no reshape after).
        out_specs=pl.BlockSpec((B, 1, D), lambda i, ids_ref: (0, 0, 0)),
        scratch_shapes=[pltpu.SemaphoreType.DMA((B,))],
    )

    out = pl.pallas_call(
        _gather_rows_kernel,
        out_shape=jax.ShapeDtypeStruct((B, 1, D), embedding_table.dtype),
        grid_spec=grid_spec,
        compiler_params=pltpu.CompilerParams(
            # Tiny, DMA-latency-bound work: do not shard across TensorCores.
            dimension_semantics=("arbitrary",),
        ),
    )(ids, embedding_table)

    return out


class ClassEmbedder:
    """Minimal JAX/Pallas port of the PyTorch ClassEmbedder module."""

    def __init__(self, embed_dim, n_classes=1000, key='class', prng_key=None):
        self.key = key
        if prng_key is None:
            prng_key = jax.random.PRNGKey(0)
        # nn.Embedding default init: N(0, 1)
        self.embedding_weight = jax.random.normal(
            prng_key, (n_classes, embed_dim), dtype=jnp.float32
        )

    def __call__(self, batch, key=None):
        if key is None:
            key = self.key
        c = batch[key]
        return class_embedder_forward(c, self.embedding_weight)


if __name__ == "__main__":
    embed_dim = 128
    n_classes = 1000
    B = 4

    root = jax.random.PRNGKey(0)
    k_emb, k_ids = jax.random.split(root)

    embedder = ClassEmbedder(embed_dim, n_classes=n_classes, key='class',
                             prng_key=k_emb)
    class_ids = jax.random.randint(k_ids, (B,), 0, n_classes, dtype=jnp.int32)
    batch = {'class': class_ids}

    out = embedder(batch)
    out = jax.block_until_ready(out)

    # Reference check against plain-JAX embedding lookup.
    ref = embedder.embedding_weight[class_ids][:, None, :]
    assert out.shape == (B, 1, embed_dim), out.shape
    assert jnp.allclose(out, ref), "mismatch vs reference gather"

    print("KERNEL_OK")
</pallas_src>

<mosaic_0001>
module attributes {stable_mosaic.version = 11 : i64} {
  func.func @_gather_rows_kernel(%arg0: i32, %arg1: memref<4xi32, #tpu.memory_space<smem>>, %arg2: memref<1000x128xf32, #tpu.memory_space<any>>, %arg3: memref<4x1x128xf32, #tpu.memory_space<vmem>>, %arg4: memref<4x!tpu.dma_semaphore, #tpu.memory_space<semaphore_mem>>) attributes {dimension_semantics = [#tpu.dimension_semantics<arbitrary>], iteration_bounds = array<i64: 1>, scalar_prefetch = 1 : i64, scratch_operands = 1 : i64, tpu.core_type = #tpu.core_type<tc>, window_params = [{}, {pipeline_mode = #tpu.pipeline_mode<synchronous>, transform_indices = @transform_1, window_bounds = array<i64: 4, 1, 128>}]} {
    %c0 = arith.constant 0 : index
    %0 = memref.load %arg1[%c0] : memref<4xi32, #tpu.memory_space<smem>>
    %c0_i32 = arith.constant 0 : i32
    %c0_i32_0 = arith.constant 0 : i32
    %c0_i32_1 = arith.constant 0 : i32
    %1 = tpu.memref_slice %arg2[%0, %c0_i32_1] : memref<1000x128xf32, #tpu.memory_space<any>> -> memref<1x128xf32, #tpu.memory_space<any>>
    %c0_i32_2 = arith.constant 0 : i32
    %c0_i32_3 = arith.constant 0 : i32
    %2 = tpu.memref_slice %arg3[%c0_i32, %c0_i32_2, %c0_i32_3] : memref<4x1x128xf32, #tpu.memory_space<vmem>> -> memref<1x1x128xf32, #tpu.memory_space<vmem>>
    %3 = tpu.memref_squeeze %2 : memref<1x1x128xf32, #tpu.memory_space<vmem>> -> memref<1x128xf32, #tpu.memory_space<vmem>>
    %4 = tpu.memref_slice %arg4[%c0_i32_0] : memref<4x!tpu.dma_semaphore, #tpu.memory_space<semaphore_mem>> -> memref<1x!tpu.dma_semaphore, #tpu.memory_space<semaphore_mem>>
    %5 = tpu.memref_squeeze %4 : memref<1x!tpu.dma_semaphore, #tpu.memory_space<semaphore_mem>> -> memref<!tpu.dma_semaphore, #tpu.memory_space<semaphore_mem>>
    tpu.enqueue_dma source(%1 : memref<1x128xf32, #tpu.memory_space<any>>) target(%3 : memref<1x128xf32, #tpu.memory_space<vmem>>) target_semaphore(%5 : memref<!tpu.dma_semaphore, #tpu.memory_space<semaphore_mem>>)
    %c1 = arith.constant 1 : index
    %6 = memref.load %arg1[%c1] : memref<4xi32, #tpu.memory_space<smem>>
    %c1_i32 = arith.constant 1 : i32
    %c1_i32_4 = arith.constant 1 : i32
    %c0_i32_5 = arith.constant 0 : i32
    %7 = tpu.memref_slice %arg2[%6, %c0_i32_5] : memref<1000x128xf32, #tpu.memory_space<any>> -> memref<1x128xf32, #tpu.memory_space<any>>
    %c0_i32_6 = arith.constant 0 : i32
    %c0_i32_7 = arith.constant 0 : i32
    %8 = tpu.memref_slice %arg3[%c1_i32, %c0_i32_6, %c0_i32_7] : memref<4x1x128xf32, #tpu.memory_space<vmem>> -> memref<1x1x128xf32, #tpu.memory_space<vmem>>
    %9 = tpu.memref_squeeze %8 : memref<1x1x128xf32, #tpu.memory_space<vmem>> -> memref<1x128xf32, #tpu.memory_space<vmem>>
    %10 = tpu.memref_slice %arg4[%c1_i32_4] : memref<4x!tpu.dma_semaphore, #tpu.memory_space<semaphore_mem>> -> memref<1x!tpu.dma_semaphore, #tpu.memory_space<semaphore_mem>>
    %11 = tpu.memref_squeeze %10 : memref<1x!tpu.dma_semaphore, #tpu.memory_space<semaphore_mem>> -> memref<!tpu.dma_semaphore, #tpu.memory_space<semaphore_mem>>
    tpu.enqueue_dma source(%7 : memref<1x128xf32, #tpu.memory_space<any>>) target(%9 : memref<1x128xf32, #tpu.memory_space<vmem>>) target_semaphore(%11 : memref<!tpu.dma_semaphore, #tpu.memory_space<semaphore_mem>>)
    %c2 = arith.constant 2 : index
    %12 = memref.load %arg1[%c2] : memref<4xi32, #tpu.memory_space<smem>>
    %c2_i32 = arith.constant 2 : i32
    %c2_i32_8 = arith.constant 2 : i32
    %c0_i32_9 = arith.constant 0 : i32
    %13 = tpu.memref_slice %arg2[%12, %c0_i32_9] : memref<1000x128xf32, #tpu.memory_space<any>> -> memref<1x128xf32, #tpu.memory_space<any>>
    %c0_i32_10 = arith.constant 0 : i32
    %c0_i32_11 = arith.constant 0 : i32
    %14 = tpu.memref_slice %arg3[%c2_i32, %c0_i32_10, %c0_i32_11] : memref<4x1x128xf32, #tpu.memory_space<vmem>> -> memref<1x1x128xf32, #tpu.memory_space<vmem>>
    %15 = tpu.memref_squeeze %14 : memref<1x1x128xf32, #tpu.memory_space<vmem>> -> memref<1x128xf32, #tpu.memory_space<vmem>>
    %16 = tpu.memref_slice %arg4[%c2_i32_8] : memref<4x!tpu.dma_semaphore, #tpu.memory_space<semaphore_mem>> -> memref<1x!tpu.dma_semaphore, #tpu.memory_space<semaphore_mem>>
    %17 = tpu.memref_squeeze %16 : memref<1x!tpu.dma_semaphore, #tpu.memory_space<semaphore_mem>> -> memref<!tpu.dma_semaphore, #tpu.memory_space<semaphore_mem>>
    tpu.enqueue_dma source(%13 : memref<1x128xf32, #tpu.memory_space<any>>) target(%15 : memref<1x128xf32, #tpu.memory_space<vmem>>) target_semaphore(%17 : memref<!tpu.dma_semaphore, #tpu.memory_space<semaphore_mem>>)
    %c3 = arith.constant 3 : index
    %18 = memref.load %arg1[%c3] : memref<4xi32, #tpu.memory_space<smem>>
    %c3_i32 = arith.constant 3 : i32
    %c3_i32_12 = arith.constant 3 : i32
    %c0_i32_13 = arith.constant 0 : i32
    %19 = tpu.memref_slice %arg2[%18, %c0_i32_13] : memref<1000x128xf32, #tpu.memory_space<any>> -> memref<1x128xf32, #tpu.memory_space<any>>
    %c0_i32_14 = arith.constant 0 : i32
    %c0_i32_15 = arith.constant 0 : i32
    %20 = tpu.memref_slice %arg3[%c3_i32, %c0_i32_14, %c0_i32_15] : memref<4x1x128xf32, #tpu.memory_space<vmem>> -> memref<1x1x128xf32, #tpu.memory_space<vmem>>
    %21 = tpu.memref_squeeze %20 : memref<1x1x128xf32, #tpu.memory_space<vmem>> -> memref<1x128xf32, #tpu.memory_space<vmem>>
    %22 = tpu.memref_slice %arg4[%c3_i32_12] : memref<4x!tpu.dma_semaphore, #tpu.memory_space<semaphore_mem>> -> memref<1x!tpu.dma_semaphore, #tpu.memory_space<semaphore_mem>>
    %23 = tpu.memref_squeeze %22 : memref<1x!tpu.dma_semaphore, #tpu.memory_space<semaphore_mem>> -> memref<!tpu.dma_semaphore, #tpu.memory_space<semaphore_mem>>
    tpu.enqueue_dma source(%19 : memref<1x128xf32, #tpu.memory_space<any>>) target(%21 : memref<1x128xf32, #tpu.memory_space<vmem>>) target_semaphore(%23 : memref<!tpu.dma_semaphore, #tpu.memory_space<semaphore_mem>>)
    %c0_i32_16 = arith.constant 0 : i32
    %c0_i32_17 = arith.constant 0 : i32
    %c0_i32_18 = arith.constant 0 : i32
    %24 = tpu.memref_slice %arg2[%0, %c0_i32_18] : memref<1000x128xf32, #tpu.memory_space<any>> -> memref<1x128xf32, #tpu.memory_space<any>>
    %c0_i32_19 = arith.constant 0 : i32
    %c0_i32_20 = arith.constant 0 : i32
    %25 = tpu.memref_slice %arg3[%c0_i32_16, %c0_i32_19, %c0_i32_20] : memref<4x1x128xf32, #tpu.memory_space<vmem>> -> memref<1x1x128xf32, #tpu.memory_space<vmem>>
    %26 = tpu.memref_squeeze %25 : memref<1x1x128xf32, #tpu.memory_space<vmem>> -> memref<1x128xf32, #tpu.memory_space<vmem>>
    %27 = tpu.memref_slice %arg4[%c0_i32_17] : memref<4x!tpu.dma_semaphore, #tpu.memory_space<semaphore_mem>> -> memref<1x!tpu.dma_semaphore, #tpu.memory_space<semaphore_mem>>
    %28 = tpu.memref_squeeze %27 : memref<1x!tpu.dma_semaphore, #tpu.memory_space<semaphore_mem>> -> memref<!tpu.dma_semaphore, #tpu.memory_space<semaphore_mem>>
    tpu.wait_dma2 semaphore(%28 : memref<!tpu.dma_semaphore, #tpu.memory_space<semaphore_mem>>) src(%24 : memref<1x128xf32, #tpu.memory_space<any>>) dst(%26 : memref<1x128xf32, #tpu.memory_space<vmem>>)
    %c1_i32_21 = arith.constant 1 : i32
    %c1_i32_22 = arith.constant 1 : i32
    %c0_i32_23 = arith.constant 0 : i32
    %29 = tpu.memref_slice %arg2[%6, %c0_i32_23] : memref<1000x128xf32, #tpu.memory_space<any>> -> memref<1x128xf32, #tpu.memory_space<any>>
    %c0_i32_24 = arith.constant 0 : i32
    %c0_i32_25 = arith.constant 0 : i32
    %30 = tpu.memref_slice %arg3[%c1_i32_21, %c0_i32_24, %c0_i32_25] : memref<4x1x128xf32, #tpu.memory_space<vmem>> -> memref<1x1x128xf32, #tpu.memory_space<vmem>>
    %31 = tpu.memref_squeeze %30 : memref<1x1x128xf32, #tpu.memory_space<vmem>> -> memref<1x128xf32, #tpu.memory_space<vmem>>
    %32 = tpu.memref_slice %arg4[%c1_i32_22] : memref<4x!tpu.dma_semaphore, #tpu.memory_space<semaphore_mem>> -> memref<1x!tpu.dma_semaphore, #tpu.memory_space<semaphore_mem>>
    %33 = tpu.memref_squeeze %32 : memref<1x!tpu.dma_semaphore, #tpu.memory_space<semaphore_mem>> -> memref<!tpu.dma_semaphore, #tpu.memory_space<semaphore_mem>>
    tpu.wait_dma2 semaphore(%33 : memref<!tpu.dma_semaphore, #tpu.memory_space<semaphore_mem>>) src(%29 : memref<1x128xf32, #tpu.memory_space<any>>) dst(%31 : memref<1x128xf32, #tpu.memory_space<vmem>>)
    %c2_i32_26 = arith.constant 2 : i32
    %c2_i32_27 = arith.constant 2 : i32
    %c0_i32_28 = arith.constant 0 : i32
    %34 = tpu.memref_slice %arg2[%12, %c0_i32_28] : memref<1000x128xf32, #tpu.memory_space<any>> -> memref<1x128xf32, #tpu.memory_space<any>>
    %c0_i32_29 = arith.constant 0 : i32
    %c0_i32_30 = arith.constant 0 : i32
    %35 = tpu.memref_slice %arg3[%c2_i32_26, %c0_i32_29, %c0_i32_30] : memref<4x1x128xf32, #tpu.memory_space<vmem>> -> memref<1x1x128xf32, #tpu.memory_space<vmem>>
    %36 = tpu.memref_squeeze %35 : memref<1x1x128xf32, #tpu.memory_space<vmem>> -> memref<1x128xf32, #tpu.memory_space<vmem>>
    %37 = tpu.memref_slice %arg4[%c2_i32_27] : memref<4x!tpu.dma_semaphore, #tpu.memory_space<semaphore_mem>> -> memref<1x!tpu.dma_semaphore, #tpu.memory_space<semaphore_mem>>
    %38 = tpu.memref_squeeze %37 : memref<1x!tpu.dma_semaphore, #tpu.memory_space<semaphore_mem>> -> memref<!tpu.dma_semaphore, #tpu.memory_space<semaphore_mem>>
    tpu.wait_dma2 semaphore(%38 : memref<!tpu.dma_semaphore, #tpu.memory_space<semaphore_mem>>) src(%34 : memref<1x128xf32, #tpu.memory_space<any>>) dst(%36 : memref<1x128xf32, #tpu.memory_space<vmem>>)
    %c3_i32_31 = arith.constant 3 : i32
    %c3_i32_32 = arith.constant 3 : i32
    %c0_i32_33 = arith.constant 0 : i32
    %39 = tpu.memref_slice %arg2[%18, %c0_i32_33] : memref<1000x128xf32, #tpu.memory_space<any>> -> memref<1x128xf32, #tpu.memory_space<any>>
    %c0_i32_34 = arith.constant 0 : i32
    %c0_i32_35 = arith.constant 0 : i32
    %40 = tpu.memref_slice %arg3[%c3_i32_31, %c0_i32_34, %c0_i32_35] : memref<4x1x128xf32, #tpu.memory_space<vmem>> -> memref<1x1x128xf32, #tpu.memory_space<vmem>>
    %41 = tpu.memref_squeeze %40 : memref<1x1x128xf32, #tpu.memory_space<vmem>> -> memref<1x128xf32, #tpu.memory_space<vmem>>
    %42 = tpu.memref_slice %arg4[%c3_i32_32] : memref<4x!tpu.dma_semaphore, #tpu.memory_space<semaphore_mem>> -> memref<1x!tpu.dma_semaphore, #tpu.memory_space<semaphore_mem>>
    %43 = tpu.memref_squeeze %42 : memref<1x!tpu.dma_semaphore, #tpu.memory_space<semaphore_mem>> -> memref<!tpu.dma_semaphore, #tpu.memory_space<semaphore_mem>>
    tpu.wait_dma2 semaphore(%43 : memref<!tpu.dma_semaphore, #tpu.memory_space<semaphore_mem>>) src(%39 : memref<1x128xf32, #tpu.memory_space<any>>) dst(%41 : memref<1x128xf32, #tpu.memory_space<vmem>>)
    return
  }
  func.func @transform_1(%arg0: i32, %arg1: memref<4xi32, #tpu.memory_space<smem>>) -> (i32, i32, i32) {
    %c0_i32 = arith.constant 0 : i32
    %c0_i32_0 = arith.constant 0 : i32
    %c0_i32_1 = arith.constant 0 : i32
    %c0_i32_2 = arith.constant 0 : i32
    return %c0_i32, %c0_i32_0, %c0_i32_1 : i32, i32, i32
  }
}

</mosaic_0001>

<llo_original>
// kernel: tpu_custom_call.1
$region0: #{tpu_custom_call.1}
  #allocation0 [shape = 'u32[]', space=smem, size = 0x4, offset = 0x4, fixed_abs, tag = 'smem constant byte address 0x4 - core index']
  #allocation1 [shape = 'u32[144,128]{1,0:T(1,128)}', space=vmem, size = 0x12000, scoped, tag = 'internal scratch']
  #allocation2 [shape = 's32[4]{0}', space=sflag, size = 0x10, scoped, tag = 'scratch operand']
  #allocation3 [shape = 's32[1]{0}', space=sflag, size = 0x4, scoped, tag = 'scoped memory for tpu_custom_call.1']
  #allocation4 [shape = 'u8[512]{0}', space=smem, size = 0x200, scoped, tag = 'prefetched SMEM operand 0']
  #allocation7 [shape = 's32[]', space=sflag, size = 0x4, offset = 0, fixed_abs, tag = 'sflag constant byte address 0x0 - dummy sync flag']
  #allocation8 [shape = 's32[]', space=sflag, size = 0x4, offset = 0, fixed_abs, tag = 'sflag constant byte address 0x0 - dummy sync flag']
  #allocation9 [shape = 'u32[]', space=smem, size = 0x4, offset = 0x44, fixed_abs, tag = 'smem constant byte address 0x44 - assertion arg 0']
  #allocation10 [shape = 'u32[]', space=smem, size = 0x4, offset = 0x48, fixed_abs, tag = 'smem constant byte address 0x48 - assertion arg 1']
  #allocation11 [shape = 's32[]', space=sflag, size = 0x4, offset = 0, fixed_abs, tag = 'sflag constant byte address 0x0 - dummy sync flag']
  #allocation12 [shape = 's32[]', space=sflag, size = 0x4, offset = 0, fixed_abs, tag = 'sflag constant byte address 0x0 - dummy sync flag']
  #allocation13 [shape = 's32[]', space=sflag, size = 0x4, offset = 0, fixed_abs, tag = 'sflag constant byte address 0x0 - dummy sync flag']
  #allocation14 [shape = 's32[]', space=sflag, size = 0x4, offset = 0, fixed_abs, tag = 'sflag constant byte address 0x0 - dummy sync flag']
  #allocation15 [shape = 's32[]', space=sflag, size = 0x4, offset = 0, fixed_abs, tag = 'sflag constant byte address 0x0 - dummy sync flag']
  #allocation16 [shape = 's32[]', space=sflag, size = 0x4, offset = 0, fixed_abs, tag = 'sflag constant byte address 0x0 - dummy sync flag']
  %s0 = inlined_call_operand.hbm [shape: s32[4], index: 0, kind: input, shape index: {}]
  %s1 = inlined_call_operand.hbm [shape: f32[1000,128], index: 1, kind: input, shape index: {}]
  %s2 = inlined_call_operand.hbm [shape: f32[4,1,128], index: 2, kind: output, shape index: {}]
  %s3 = sld [smem:[#allocation0]]
  $region26: #{tpu_custom_call.1} parent=0
    _
  %s5 = ssub.s32 1, %s3
  %s6 = scalar_select 0, %s5, %s3
  %8 = dma.hbm_to_smem %s0, 16, [#allocation4], [#allocation3]
  %9 = dma.done [#allocation3], 16
  %10 = sfence
  $region1: #{tpu_custom_call.1} parent=0
    #allocation5 [shape = 'u8[2048]{0}', space=vmem, size = 0x800, scoped, tag = 'output window, operand 0, single buffered']
    #allocation6 [shape = 's32[1]{0}', space=sflag, size = 0x4, scoped, tag = 'scoped memory for tpu_custom_call.1']
    %11 = vsyncpa [#allocation6], 0
    %s12 = sld [smem:[#allocation4]]
    %s13 = smul.addr %s12, 16
    %s14 = scalar_lea.hbm %s1, %s13
    // Predicated region
    $region2: #{tpu_custom_call.1} parent=1 // pred_check
      _
    $region3: #{tpu_custom_call.1} parent=1 // pred_check_branch
      %16 = sbr.rel target = $region5
    $region4: #{tpu_custom_call.1} parent=1 // pred_region
      %17 = sst [smem:[#allocation9]] [#allocation8]
      %18 = sst [smem:[#allocation10]] [#allocation7]
    $region5: #{tpu_custom_call.1} parent=1 // pred_fallthru
      _
    %20 = shalt.err (0)
    %s22 = sshll.u32 [#allocation5], 4
    %s23 = int_to_ptr.vmem [resolvable:$true] %s22
    %25 = dma.hbm_to_vmem [thread:$0]  %s14, 16, %s23, [#allocation2]
    %s26 = sld [smem:[#allocation4 + $0x1]]
    %s27 = smul.addr %s26, 16
    %s28 = scalar_lea.hbm %s1, %s27
    %s29 = scalar_lea.vmem [#allocation5], 1
    %s30 = scalar_lea.sflag [#allocation2], 1
    // Predicated region
    $region6: #{tpu_custom_call.1} parent=1 // pred_check
      _
    $region7: #{tpu_custom_call.1} parent=1 // pred_check_branch
      %32 = sbr.rel target = $region9
    $region8: #{tpu_custom_call.1} parent=1 // pred_region
      %33 = sst [smem:[#allocation9]] [#allocation12]
      %34 = sst [smem:[#allocation10]] [#allocation11]
    $region9: #{tpu_custom_call.1} parent=1 // pred_fallthru
      _
    %36 = shalt.err (0)
    %s38 = sshll.u32 %s29, 4
    %s39 = int_to_ptr.vmem [resolvable:$true] %s38
    %41 = dma.hbm_to_vmem [thread:$0]  %s28, 16, %s39, %s30
    %s42 = sld [smem:[#allocation4 + $0x2]]
    %s43 = smul.addr %s42, 16
    %s44 = scalar_lea.hbm %s1, %s43
    %s45 = scalar_lea.vmem [#allocation5], 2
    %s46 = scalar_lea.sflag [#allocation2], 2
    // Predicated region
    $region10: #{tpu_custom_call.1} parent=1 // pred_check
      _
    $region11: #{tpu_custom_call.1} parent=1 // pred_check_branch
      %48 = sbr.rel target = $region13
    $region12: #{tpu_custom_call.1} parent=1 // pred_region
      %49 = sst [smem:[#allocation9]] [#allocation14]
      %50 = sst [smem:[#allocation10]] [#allocation13]
    $region13: #{tpu_custom_call.1} parent=1 // pred_fallthru
      _
    %52 = shalt.err (0)
    %s54 = sshll.u32 %s45, 4
    %s55 = int_to_ptr.vmem [resolvable:$true] %s54
    %57 = dma.hbm_to_vmem [thread:$0]  %s44, 16, %s55, %s46
    %s58 = sld [smem:[#allocation4 + $0x3]]
    %s59 = smul.addr %s58, 16
    %s60 = scalar_lea.hbm %s1, %s59
    %s61 = scalar_lea.vmem [#allocation5], 3
    %s62 = scalar_lea.sflag [#allocation2], 3
    // Predicated region
    $region14: #{tpu_custom_call.1} parent=1 // pred_check
      _
    $region15: #{tpu_custom_call.1} parent=1 // pred_check_branch
      %64 = sbr.rel target = $region17
    $region16: #{tpu_custom_call.1} parent=1 // pred_region
      %65 = sst [smem:[#allocation9]] [#allocation16]
      %66 = sst [smem:[#allocation10]] [#allocation15]
    $region17: #{tpu_custom_call.1} parent=1 // pred_fallthru
      _
    %68 = shalt.err (0)
    %s70 = sshll.u32 %s61, 4
    %s71 = int_to_ptr.vmem [resolvable:$true] %s70
    %73 = dma.hbm_to_vmem [thread:$0]  %s60, 16, %s71, %s62
    %s74 = smul.u32 1, 1
    %s75 = sshll.u32 %s74, 4
    %76 = dma.done [#allocation2], %s75
    %s77 = sshll.u32 %s74, 4
    %78 = dma.done %s30, %s77
    %s79 = sshll.u32 %s74, 4
    %80 = dma.done %s46, %s79
    %s81 = sshll.u32 %s74, 4
    %82 = dma.done %s62, %s81
    // Predicated region
    $region18: #{tpu_custom_call.1} parent=1 // pred_check
      _
    $region19: #{tpu_custom_call.1} parent=1 // pred_check_branch
      %84 = sbr.rel (0) target = $region21
    $region20: #{tpu_custom_call.1} parent=1 // pred_region
      %s86 = ssub.s32 64, 64
      %87 = vsyncadd [#allocation6], %s86
      %s88 = sshll.u32 [#allocation5], 4
      %s89 = int_to_ptr.vmem [resolvable:$true] %s88
      %94 = dma.vmem_to_hbm [thread:$0]  %s89, 64, %s2, [#allocation6], 16, 16, 1
    $region21: #{tpu_custom_call.1} parent=1 // pred_fallthru
      _
    // Predicated region
    $region22: #{tpu_custom_call.1} parent=1 // pred_check
      _
    $region23: #{tpu_custom_call.1} parent=1 // pred_check_branch
      %96 = sbr.rel (0) target = $region25
    $region24: #{tpu_custom_call.1} parent=1 // pred_region
      %97 = dma.done [#allocation6], 64
    $region25: #{tpu_custom_call.1} parent=1 // pred_fallthru
      _
    %98 = vsyncpa [#allocation6], 1
  %99 = vsyncmov [#allocation2]
  %s100 = vpop.sfrf %99
  %p101 = scmp.eq.s32.totalorder %s100, 0
  %p102 = pneg %p101
  %104 = shalt.err (%p102)
  %s105 = scalar_lea.sflag [#allocation2], 1
  %106 = vsyncmov %s105
  %s107 = vpop.sfrf %106
  %p108 = scmp.eq.s32.totalorder %s107, 0
  %p109 = pneg %p108
  %111 = shalt.err (%p109)
  %s112 = scalar_lea.sflag [#allocation2], 2
  %113 = vsyncmov %s112
  %s114 = vpop.sfrf %113
  %p115 = scmp.eq.s32.totalorder %s114, 0
  %p116 = pneg %p115
  %118 = shalt.err (%p116)
  %s119 = scalar_lea.sflag [#allocation2], 3
  %120 = vsyncmov %s119
  %s121 = vpop.sfrf %120
  %p122 = scmp.eq.s32.totalorder %s121, 0
  %p123 = pneg %p122
  %125 = shalt.err (%p123)

</llo_original>
